<compile_context>
chip_gen: v7x
topology: tpu7x:2x2x1
jax: 0.10.0
libtpu: 0.0.40
codegen_flags: <defaults>
</compile_context>

<pallas_src>
import functools

import jax
import jax.numpy as jnp
from jax.experimental import pallas as pl
from jax.experimental.pallas import tpu as pltpu

LANE = 128          # lane width: pad all feature dims to a multiple of this
SUBLANE = 8         # batch tiles must be a multiple of this
MAX_BATCH_TILE = 256


def _round_up(v, m):
    return (v + m - 1) // m * m


# ---------------------------------------------------------------------------
# Kernel: fused [Linear + ReLU] * n_layers on one batch tile.
# Weights/biases are whole-array VMEM-resident blocks (constant index_map);
# only the activation tile moves per grid step.
# ---------------------------------------------------------------------------
def _mlp_kernel(n_layers, x_ref, *refs):
    o_ref = refs[-1]
    param_refs = refs[:-1]

    h = x_ref[...].astype(jnp.float32)
    for i in range(n_layers):                       # static unroll (4 layers)
        w = param_refs[2 * i][...]                  # [d_in_pad, d_out_pad] bf16
        b = param_refs[2 * i + 1][...]              # [1, d_out_pad]        f32
        h = jnp.dot(h.astype(w.dtype), w, preferred_element_type=jnp.float32)
        h = jnp.maximum(h + b, 0.0)                 # bias-add + ReLU in f32
    o_ref[...] = h.astype(o_ref.dtype)


def neural_net_forward(x, padded_params):
    """Fused MLP forward.

    x:             [batch, input_dimension] float32 (unpadded)
    padded_params: list of (W, b) already lane-padded:
                   W: [d_in_pad, d_out_pad] bfloat16, b: [1, d_out_pad] float32
    Returns [batch, true_output_dimension] float32.
    """
    n_layers = len(padded_params)
    batch, in_dim = x.shape
    in_dim_pad = padded_params[0][0].shape[0]
    out_dim_pad = padded_params[-1][0].shape[1]

    # --- pad batch + input lanes so every block is (8,128)-aligned ----------
    padded_batch = _round_up(batch, SUBLANE)
    tb = min(MAX_BATCH_TILE, padded_batch)
    padded_batch = _round_up(padded_batch, tb)
    x_pad = jnp.zeros((padded_batch, in_dim_pad), x.dtype).at[:batch, :in_dim].set(x)

    flat_params = []
    for w, b in padded_params:
        flat_params.extend([w, b])

    # --- BlockSpecs ---------------------------------------------------------
    x_spec = pl.BlockSpec((tb, in_dim_pad), lambda i: (i, 0))
    out_spec = pl.BlockSpec((tb, out_dim_pad), lambda i: (i, 0))
    param_specs = []
    for w, b in padded_params:
        param_specs.append(pl.BlockSpec(w.shape, lambda i: (0, 0)))   # resident
        param_specs.append(pl.BlockSpec(b.shape, lambda i: (0, 0)))   # resident

    # --- cost estimate (advisory) -------------------------------------------
    flops = 0
    param_bytes = 0
    for w, b in padded_params:
        flops += 2 * padded_batch * w.shape[0] * w.shape[1]
        param_bytes += w.size * w.dtype.itemsize + b.size * b.dtype.itemsize
    bytes_accessed = (x_pad.size * x_pad.dtype.itemsize
                      + padded_batch * out_dim_pad * 4
                      + param_bytes)
    cost = pl.CostEstimate(flops=flops, transcendentals=0,
                           bytes_accessed=bytes_accessed)

    kernel = functools.partial(_mlp_kernel, n_layers)
    out_pad = pl.pallas_call(
        kernel,
        out_shape=jax.ShapeDtypeStruct((padded_batch, out_dim_pad), x.dtype),
        grid=(padded_batch // tb,),
        in_specs=[x_spec] + param_specs,
        out_specs=out_spec,
        compiler_params=pltpu.CompilerParams(
            dimension_semantics=("parallel",)),   # megacore split on v7x
        cost_estimate=cost,
    )(x_pad, *flat_params)
    return out_pad


# ---------------------------------------------------------------------------
# Deterministic parameter construction (mirrors NeuralNet.__init__)
# ---------------------------------------------------------------------------
def build_params(key, input_dimension, output_dimension, hidden_dimension,
                 encoded_dimension, num_hidden_encoder=1, num_hidden_decoder=1):
    if hidden_dimension <= encoded_dimension:
        hidden_dimension = encoded_dimension * 2

    layer_dims = []
    layer_dims.append((input_dimension, hidden_dimension))            # encoder_input
    c = hidden_dimension - encoded_dimension
    for _ in range(num_hidden_encoder - 1):                           # encoder_hidden
        layer_dims.append((encoded_dimension + c, encoded_dimension + c // 2))
        c //= 2
    layer_dims.append((encoded_dimension + c, encoded_dimension))     # encoder_output
    c = hidden_dimension - encoded_dimension
    # dropout(p=0) -> identity, no params
    layer_dims.append(                                                # decoder_input
        (encoded_dimension, encoded_dimension + c // 2 ** (num_hidden_decoder - 1)))
    for i in range(num_hidden_decoder - 1):                           # decoder_hidden
        layer_dims.append(
            (encoded_dimension + c // 2 ** (num_hidden_decoder - 1 - i),
             encoded_dimension + c // 2 ** (num_hidden_decoder - 2 - i)))
    layer_dims.append((hidden_dimension, output_dimension))           # decoder_output

    params = []
    for (d_in, d_out) in layer_dims:
        key, kw, kb = jax.random.split(key, 3)
        bound = 1.0 / jnp.sqrt(d_in)            # torch.nn.Linear default init range
        w = jax.random.uniform(kw, (d_in, d_out), jnp.float32, -bound, bound)
        b = jax.random.uniform(kb, (1, d_out), jnp.float32, -bound, bound)
        params.append((w, b))
    return params


def pad_params(params, weight_dtype=jnp.bfloat16):
    """Zero-pad every layer width to a multiple of 128 lanes and cast weights.

    Padded lanes stay exactly zero through (x @ W + b) and ReLU, so slicing
    the true output columns recovers the unpadded result exactly.
    """
    padded = []
    for w, b in params:
        d_in, d_out = w.shape
        d_in_p, d_out_p = _round_up(d_in, LANE), _round_up(d_out, LANE)
        w_p = jnp.zeros((d_in_p, d_out_p), jnp.float32).at[:d_in, :d_out].set(w)
        b_p = jnp.zeros((1, d_out_p), jnp.float32).at[:, :d_out].set(b)
        padded.append((w_p.astype(weight_dtype), b_p))
    return padded


# Pure-JAX reference doing the same arithmetic (bf16 MXU inputs, f32 accum).
def reference_forward_padded(x, padded_params, in_dim_pad):
    batch, in_dim = x.shape
    h = jnp.zeros((batch, in_dim_pad), jnp.float32).at[:, :in_dim].set(x)
    for w, b in padded_params:
        h = jnp.dot(h.astype(w.dtype), w, preferred_element_type=jnp.float32)
        h = jnp.maximum(h + b, 0.0)
    return h


# TODO(synk): nn.Dropout with drop_probability > 0 (training-mode RNG masking)
# is not implemented; with the default drop_probability=0 it is an exact identity.
# TODO(synk): only the default activation='relu' path is implemented (selu/elu unused).

if __name__ == "__main__":
    key = jax.random.PRNGKey(0)
    k_params, k_x = jax.random.split(key)

    input_dimension = 16
    output_dimension = 16
    hidden_dimension = 32
    encoded_dimension = 8
    batch = 256                     # large enough to exercise the batch grid

    params = build_params(k_params, input_dimension, output_dimension,
                          hidden_dimension, encoded_dimension,
                          num_hidden_encoder=1, num_hidden_decoder=1)
    padded_params = pad_params(params, weight_dtype=jnp.bfloat16)
    in_dim_pad = padded_params[0][0].shape[0]

    x = jax.random.normal(k_x, (batch, input_dimension), jnp.float32)

    out_pad = neural_net_forward(x, padded_params)
    out_pad = jax.block_until_ready(out_pad)
    out = out_pad[:batch, :output_dimension]

    ref = reference_forward_padded(x, padded_params, in_dim_pad)
    ref = ref[:batch, :output_dimension]

    assert out.shape == (batch, output_dimension)
    assert jnp.allclose(out, ref, atol=1e-3, rtol=1e-3), (
        float(jnp.max(jnp.abs(out - ref))))

    print("KERNEL_OK")
</pallas_src>

<mosaic_0001>
module attributes {stable_mosaic.version = 11 : i64} {
  func.func @_mlp_kernel(%arg0: i32, %arg1: memref<256x128xf32, #tpu.memory_space<vmem>>, %arg2: memref<128x128xbf16, #tpu.memory_space<vmem>>, %arg3: memref<1x128xf32, #tpu.memory_space<vmem>>, %arg4: memref<128x128xbf16, #tpu.memory_space<vmem>>, %arg5: memref<1x128xf32, #tpu.memory_space<vmem>>, %arg6: memref<128x128xbf16, #tpu.memory_space<vmem>>, %arg7: memref<1x128xf32, #tpu.memory_space<vmem>>, %arg8: memref<128x128xbf16, #tpu.memory_space<vmem>>, %arg9: memref<1x128xf32, #tpu.memory_space<vmem>>, %arg10: memref<256x128xf32, #tpu.memory_space<vmem>>) attributes {dimension_semantics = [#tpu.dimension_semantics<parallel>], iteration_bounds = array<i64: 1>, scalar_prefetch = 0 : i64, scratch_operands = 0 : i64, tpu.core_type = #tpu.core_type<tc>, window_params = [{transform_indices = @transform_0, window_bounds = array<i64: 256, 128>}, {pipeline_mode = #tpu.pipeline_mode<synchronous>, transform_indices = @transform_1, window_bounds = array<i64: 128, 128>}, {pipeline_mode = #tpu.pipeline_mode<synchronous>, transform_indices = @transform_2, window_bounds = array<i64: 1, 128>}, {pipeline_mode = #tpu.pipeline_mode<synchronous>, transform_indices = @transform_3, window_bounds = array<i64: 128, 128>}, {pipeline_mode = #tpu.pipeline_mode<synchronous>, transform_indices = @transform_4, window_bounds = array<i64: 1, 128>}, {pipeline_mode = #tpu.pipeline_mode<synchronous>, transform_indices = @transform_5, window_bounds = array<i64: 128, 128>}, {pipeline_mode = #tpu.pipeline_mode<synchronous>, transform_indices = @transform_6, window_bounds = array<i64: 1, 128>}, {pipeline_mode = #tpu.pipeline_mode<synchronous>, transform_indices = @transform_7, window_bounds = array<i64: 128, 128>}, {pipeline_mode = #tpu.pipeline_mode<synchronous>, transform_indices = @transform_8, window_bounds = array<i64: 1, 128>}, {transform_indices = @transform_9, window_bounds = array<i64: 256, 128>}]} {
    %c0 = arith.constant 0 : index
    %c0_0 = arith.constant 0 : index
    %0 = vector.load %arg1[%c0, %c0_0] : memref<256x128xf32, #tpu.memory_space<vmem>>, vector<256x128xf32>
    %c0_1 = arith.constant 0 : index
    %c0_2 = arith.constant 0 : index
    %1 = vector.load %arg2[%c0_1, %c0_2] : memref<128x128xbf16, #tpu.memory_space<vmem>>, vector<128x128xbf16>
    %c0_3 = arith.constant 0 : index
    %c0_4 = arith.constant 0 : index
    %2 = vector.load %arg3[%c0_3, %c0_4] : memref<1x128xf32, #tpu.memory_space<vmem>>, vector<1x128xf32>
    %3 = arith.truncf %0 : vector<256x128xf32> to vector<256x128xbf16>
    %cst = arith.constant dense<0.000000e+00> : vector<256x128xf32>
    %4 = tpu.matmul %3, %1, %cst {dimension_numbers = #tpu.dot_dimension_numbers<[1], [0], [0], [1], [0, 0, 1, 1], [], []>} : vector<256x128xbf16>, vector<128x128xbf16>, vector<256x128xf32> -> vector<256x128xf32>
    %5 = vector.broadcast %2 : vector<1x128xf32> to vector<256x128xf32>
    %6 = arith.addf %4, %5 : vector<256x128xf32>
    %cst_5 = arith.constant 0.000000e+00 : f32
    %7 = vector.broadcast %cst_5 : f32 to vector<256x128xf32>
    %8 = arith.maximumf %6, %7 : vector<256x128xf32>
    %c0_6 = arith.constant 0 : index
    %c0_7 = arith.constant 0 : index
    %9 = vector.load %arg4[%c0_6, %c0_7] : memref<128x128xbf16, #tpu.memory_space<vmem>>, vector<128x128xbf16>
    %c0_8 = arith.constant 0 : index
    %c0_9 = arith.constant 0 : index
    %10 = vector.load %arg5[%c0_8, %c0_9] : memref<1x128xf32, #tpu.memory_space<vmem>>, vector<1x128xf32>
    %11 = arith.truncf %8 : vector<256x128xf32> to vector<256x128xbf16>
    %cst_10 = arith.constant dense<0.000000e+00> : vector<256x128xf32>
    %12 = tpu.matmul %11, %9, %cst_10 {dimension_numbers = #tpu.dot_dimension_numbers<[1], [0], [0], [1], [0, 0, 1, 1], [], []>} : vector<256x128xbf16>, vector<128x128xbf16>, vector<256x128xf32> -> vector<256x128xf32>
    %13 = vector.broadcast %10 : vector<1x128xf32> to vector<256x128xf32>
    %14 = arith.addf %12, %13 : vector<256x128xf32>
    %cst_11 = arith.constant 0.000000e+00 : f32
    %15 = vector.broadcast %cst_11 : f32 to vector<256x128xf32>
    %16 = arith.maximumf %14, %15 : vector<256x128xf32>
    %c0_12 = arith.constant 0 : index
    %c0_13 = arith.constant 0 : index
    %17 = vector.load %arg6[%c0_12, %c0_13] : memref<128x128xbf16, #tpu.memory_space<vmem>>, vector<128x128xbf16>
    %c0_14 = arith.constant 0 : index
    %c0_15 = arith.constant 0 : index
    %18 = vector.load %arg7[%c0_14, %c0_15] : memref<1x128xf32, #tpu.memory_space<vmem>>, vector<1x128xf32>
    %19 = arith.truncf %16 : vector<256x128xf32> to vector<256x128xbf16>
    %cst_16 = arith.constant dense<0.000000e+00> : vector<256x128xf32>
    %20 = tpu.matmul %19, %17, %cst_16 {dimension_numbers = #tpu.dot_dimension_numbers<[1], [0], [0], [1], [0, 0, 1, 1], [], []>} : vector<256x128xbf16>, vector<128x128xbf16>, vector<256x128xf32> -> vector<256x128xf32>
    %21 = vector.broadcast %18 : vector<1x128xf32> to vector<256x128xf32>
    %22 = arith.addf %20, %21 : vector<256x128xf32>
    %cst_17 = arith.constant 0.000000e+00 : f32
    %23 = vector.broadcast %cst_17 : f32 to vector<256x128xf32>
    %24 = arith.maximumf %22, %23 : vector<256x128xf32>
    %c0_18 = arith.constant 0 : index
    %c0_19 = arith.constant 0 : index
    %25 = vector.load %arg8[%c0_18, %c0_19] : memref<128x128xbf16, #tpu.memory_space<vmem>>, vector<128x128xbf16>
    %c0_20 = arith.constant 0 : index
    %c0_21 = arith.constant 0 : index
    %26 = vector.load %arg9[%c0_20, %c0_21] : memref<1x128xf32, #tpu.memory_space<vmem>>, vector<1x128xf32>
    %27 = arith.truncf %24 : vector<256x128xf32> to vector<256x128xbf16>
    %cst_22 = arith.constant dense<0.000000e+00> : vector<256x128xf32>
    %28 = tpu.matmul %27, %25, %cst_22 {dimension_numbers = #tpu.dot_dimension_numbers<[1], [0], [0], [1], [0, 0, 1, 1], [], []>} : vector<256x128xbf16>, vector<128x128xbf16>, vector<256x128xf32> -> vector<256x128xf32>
    %29 = vector.broadcast %26 : vector<1x128xf32> to vector<256x128xf32>
    %30 = arith.addf %28, %29 : vector<256x128xf32>
    %cst_23 = arith.constant 0.000000e+00 : f32
    %31 = vector.broadcast %cst_23 : f32 to vector<256x128xf32>
    %32 = arith.maximumf %30, %31 : vector<256x128xf32>
    %c0_24 = arith.constant 0 : index
    %c0_25 = arith.constant 0 : index
    %33 = vector.load %arg10[%c0_24, %c0_25] : memref<256x128xf32, #tpu.memory_space<vmem>>, vector<256x128xf32>
    tpu.vector_store %arg10[%c0_24, %c0_25], %32 {strides = array<i32>} : memref<256x128xf32, #tpu.memory_space<vmem>>, vector<256x128xf32>,
    return
  }
  func.func @transform_0(%arg0: i32) -> (i32, i32) {
    %c0_i32 = arith.constant 0 : i32
    %c0_i32_0 = arith.constant 0 : i32
    return %arg0, %c0_i32 : i32, i32
  }
  func.func @transform_1(%arg0: i32) -> (i32, i32) {
    %c0_i32 = arith.constant 0 : i32
    %c0_i32_0 = arith.constant 0 : i32
    %c0_i32_1 = arith.constant 0 : i32
    return %c0_i32, %c0_i32_0 : i32, i32
  }
  func.func @transform_2(%arg0: i32) -> (i32, i32) {
    %c0_i32 = arith.constant 0 : i32
    %c0_i32_0 = arith.constant 0 : i32
    %c0_i32_1 = arith.constant 0 : i32
    return %c0_i32, %c0_i32_0 : i32, i32
  }
  func.func @transform_3(%arg0: i32) -> (i32, i32) {
    %c0_i32 = arith.constant 0 : i32
    %c0_i32_0 = arith.constant 0 : i32
    %c0_i32_1 = arith.constant 0 : i32
    return %c0_i32, %c0_i32_0 : i32, i32
  }
  func.func @transform_4(%arg0: i32) -> (i32, i32) {
    %c0_i32 = arith.constant 0 : i32
    %c0_i32_0 = arith.constant 0 : i32
    %c0_i32_1 = arith.constant 0 : i32
    return %c0_i32, %c0_i32_0 : i32, i32
  }
  func.func @transform_5(%arg0: i32) -> (i32, i32) {
    %c0_i32 = arith.constant 0 : i32
    %c0_i32_0 = arith.constant 0 : i32
    %c0_i32_1 = arith.constant 0 : i32
    return %c0_i32, %c0_i32_0 : i32, i32
  }
  func.func @transform_6(%arg0: i32) -> (i32, i32) {
    %c0_i32 = arith.constant 0 : i32
    %c0_i32_0 = arith.constant 0 : i32
    %c0_i32_1 = arith.constant 0 : i32
    return %c0_i32, %c0_i32_0 : i32, i32
  }
  func.func @transform_7(%arg0: i32) -> (i32, i32) {
    %c0_i32 = arith.constant 0 : i32
    %c0_i32_0 = arith.constant 0 : i32
    %c0_i32_1 = arith.constant 0 : i32
    return %c0_i32, %c0_i32_0 : i32, i32
  }
  func.func @transform_8(%arg0: i32) -> (i32, i32) {
    %c0_i32 = arith.constant 0 : i32
    %c0_i32_0 = arith.constant 0 : i32
    %c0_i32_1 = arith.constant 0 : i32
    return %c0_i32, %c0_i32_0 : i32, i32
  }
  func.func @transform_9(%arg0: i32) -> (i32, i32) {
    %c0_i32 = arith.constant 0 : i32
    %c0_i32_0 = arith.constant 0 : i32
    return %arg0, %c0_i32 : i32, i32
  }
}

</mosaic_0001>

<llo_original>
// kernel: tpu_custom_call.1
$region0: #{tpu_custom_call.1}
  #allocation0 [shape = 'u32[]', space=smem, size = 0x4, offset = 0x4, fixed_abs, tag = 'smem constant byte address 0x4 - core index']
  #allocation1 [shape = 'u32[144,128]{1,0:T(1,128)}', space=vmem, size = 0x12000, scoped, tag = 'internal scratch']
  %s0 = inlined_call_operand.hbm [shape: f32[256,128], index: 0, kind: input, shape index: {}]
  %s1 = inlined_call_operand.hbm [shape: bf16[128,128], index: 1, kind: input, shape index: {}]
  %s2 = inlined_call_operand.vmem [shape: f32[1,128], index: 2, kind: input, shape index: {}]
  %s3 = inlined_call_operand.hbm [shape: bf16[128,128], index: 3, kind: input, shape index: {}]
  %s4 = inlined_call_operand.vmem [shape: f32[1,128], index: 4, kind: input, shape index: {}]
  %s5 = inlined_call_operand.hbm [shape: bf16[128,128], index: 5, kind: input, shape index: {}]
  %s6 = inlined_call_operand.vmem [shape: f32[1,128], index: 6, kind: input, shape index: {}]
  %s7 = inlined_call_operand.hbm [shape: bf16[128,128], index: 7, kind: input, shape index: {}]
  %s8 = inlined_call_operand.vmem [shape: f32[1,128], index: 8, kind: input, shape index: {}]
  %s9 = inlined_call_operand.hbm [shape: f32[256,128], index: 9, kind: output, shape index: {}]
  %s10 = sld [smem:[#allocation0]]
  $region66: #{tpu_custom_call.1} parent=0
    _
  %s12 = ssub.s32 1, %s10
  %s13 = scalar_select 0, %s12, %s10
  $region1: #{tpu_custom_call.1} parent=0
    #allocation2 [shape = 'u8[131072]{0}', space=vmem, size = 0x20000, scoped, tag = 'input window, operand 0, single buffered']
    #allocation3 [shape = 's32[1]{0}', space=sflag, size = 0x4, scoped, tag = 'scoped memory for tpu_custom_call.1']
    #allocation4 [shape = 's32[1]{0}', space=sflag, size = 0x4, scoped, tag = 'scoped memory for tpu_custom_call.1']
    #allocation5 [shape = 'u8[32768]{0}', space=vmem, size = 0x8000, scoped, tag = 'input window, operand 1, single buffered']
    #allocation6 [shape = 's32[1]{0}', space=sflag, size = 0x4, scoped, tag = 'scoped memory for tpu_custom_call.1']
    #allocation7 [shape = 'u8[32768]{0}', space=vmem, size = 0x8000, scoped, tag = 'input window, operand 3, single buffered']
    #allocation8 [shape = 'u8[32768]{0}', space=vmem, size = 0x8000, scoped, tag = 'input window, operand 5, single buffered']
    #allocation9 [shape = 's32[1]{0}', space=sflag, size = 0x4, scoped, tag = 'scoped memory for tpu_custom_call.1']
    #allocation10 [shape = 'u8[32768]{0}', space=vmem, size = 0x8000, scoped, tag = 'input window, operand 7, single buffered']
    #allocation11 [shape = 'u8[131072]{0}', space=vmem, size = 0x20000, scoped, tag = 'output window, operand 0, single buffered']
    %14 = vsyncpa [#allocation3], 0
    %15 = vsyncpa [#allocation6], 0
    %16 = vsyncpa [#allocation9], 0
    %17 = vsyncpa [#allocation4], 0
    // Predicated region
    $region2: #{tpu_custom_call.1} parent=1 // pred_check
      _
    $region3: #{tpu_custom_call.1} parent=1 // pred_check_branch
      %19 = sbr.rel (0) target = $region5
    $region4: #{tpu_custom_call.1} parent=1 // pred_region
      %s21 = ssub.s32 4096, 4096
      %22 = vsyncadd [#allocation3], %s21
      %s23 = sshll.u32 [#allocation2], 4
      %s24 = int_to_ptr.vmem [resolvable:$true] %s23
      %29 = dma.hbm_to_vmem [thread:$0]  %s0, 4096, %s24, [#allocation3], 128, 128, 8
    $region5: #{tpu_custom_call.1} parent=1 // pred_fallthru
      _
    // Predicated region
    $region6: #{tpu_custom_call.1} parent=1 // pred_check
      _
    $region7: #{tpu_custom_call.1} parent=1 // pred_check_branch
      %31 = sbr.rel (0) target = $region9
    $region8: #{tpu_custom_call.1} parent=1 // pred_region
      %s33 = ssub.s32 1024, 1024
      %34 = vsyncadd [#allocation6], %s33
      %s35 = sshll.u32 [#allocation5], 4
      %s36 = int_to_ptr.vmem [resolvable:$true] %s35
      %41 = dma.hbm_to_vmem [thread:$0]  %s1, 1024, %s36, [#allocation6], 64, 64, 4
    $region9: #{tpu_custom_call.1} parent=1 // pred_fallthru
      _
    // Predicated region
    $region10: #{tpu_custom_call.1} parent=1 // pred_check
      _
    $region11: #{tpu_custom_call.1} parent=1 // pred_check_branch
      %43 = sbr.rel (0) target = $region13
    $region12: #{tpu_custom_call.1} parent=1 // pred_region
      _
    $region13: #{tpu_custom_call.1} parent=1 // pred_fallthru
      _
    // Predicated region
    $region14: #{tpu_custom_call.1} parent=1 // pred_check
      _
    $region15: #{tpu_custom_call.1} parent=1 // pred_check_branch
      %45 = sbr.rel (0) target = $region17
    $region16: #{tpu_custom_call.1} parent=1 // pred_region
      %s47 = ssub.s32 1024, 1024
      %48 = vsyncadd [#allocation6], %s47
      %s49 = sshll.u32 [#allocation7], 4
      %s50 = int_to_ptr.vmem [resolvable:$true] %s49
      %55 = dma.hbm_to_vmem [thread:$0]  %s3, 1024, %s50, [#allocation6], 64, 64, 4
    $region17: #{tpu_custom_call.1} parent=1 // pred_fallthru
      _
    // Predicated region
    $region18: #{tpu_custom_call.1} parent=1 // pred_check
      _
    $region19: #{tpu_custom_call.1} parent=1 // pred_check_branch
      %57 = sbr.rel (0) target = $region21
    $region20: #{tpu_custom_call.1} parent=1 // pred_region
      _
    $region21: #{tpu_custom_call.1} parent=1 // pred_fallthru
      _
    // Predicated region
    $region22: #{tpu_custom_call.1} parent=1 // pred_check
      _
    $region23: #{tpu_custom_call.1} parent=1 // pred_check_branch
      %59 = sbr.rel (0) target = $region25
    $region24: #{tpu_custom_call.1} parent=1 // pred_region
      %s61 = ssub.s32 1024, 1024
      %62 = vsyncadd [#allocation9], %s61
      %s63 = sshll.u32 [#allocation8], 4
      %s64 = int_to_ptr.vmem [resolvable:$true] %s63
      %69 = dma.hbm_to_vmem [thread:$0]  %s5, 1024, %s64, [#allocation9], 64, 64, 4
    $region25: #{tpu_custom_call.1} parent=1 // pred_fallthru
      _
    // Predicated region
    $region26: #{tpu_custom_call.1} parent=1 // pred_check
      _
    $region27: #{tpu_custom_call.1} parent=1 // pred_check_branch
      %71 = sbr.rel (0) target = $region29
    $region28: #{tpu_custom_call.1} parent=1 // pred_region
      _
    $region29: #{tpu_custom_call.1} parent=1 // pred_fallthru
      _
    // Predicated region
    $region30: #{tpu_custom_call.1} parent=1 // pred_check
      _
    $region31: #{tpu_custom_call.1} parent=1 // pred_check_branch
      %73 = sbr.rel (0) target = $region33
    $region32: #{tpu_custom_call.1} parent=1 // pred_region
      %s75 = ssub.s32 1024, 1024
      %76 = vsyncadd [#allocation9], %s75
      %s77 = sshll.u32 [#allocation10], 4
      %s78 = int_to_ptr.vmem [resolvable:$true] %s77
      %83 = dma.hbm_to_vmem [thread:$0]  %s7, 1024, %s78, [#allocation9], 64, 64, 4
    $region33: #{tpu_custom_call.1} parent=1 // pred_fallthru
      _
    // Predicated region
    $region34: #{tpu_custom_call.1} parent=1 // pred_check
      _
    $region35: #{tpu_custom_call.1} parent=1 // pred_check_branch
      %85 = sbr.rel (0) target = $region37
    $region36: #{tpu_custom_call.1} parent=1 // pred_region
      _
    $region37: #{tpu_custom_call.1} parent=1 // pred_fallthru
      _
    // Predicated region
    $region38: #{tpu_custom_call.1} parent=1 // pred_check
      _
    $region39: #{tpu_custom_call.1} parent=1 // pred_check_branch
      %87 = sbr.rel (0) target = $region41
    $region40: #{tpu_custom_call.1} parent=1 // pred_region
      %88 = dma.done [#allocation3], 4096
    $region41: #{tpu_custom_call.1} parent=1 // pred_fallthru
      _
    // Predicated region
    $region42: #{tpu_custom_call.1} parent=1 // pred_check
      _
    $region43: #{tpu_custom_call.1} parent=1 // pred_check_branch
      %90 = sbr.rel (0) target = $region45
    $region44: #{tpu_custom_call.1} parent=1 // pred_region
      %91 = dma.done [#allocation6], 1024
    $region45: #{tpu_custom_call.1} parent=1 // pred_fallthru
      _
    // Predicated region
    $region46: #{tpu_custom_call.1} parent=1 // pred_check
      _
    $region47: #{tpu_custom_call.1} parent=1 // pred_check_branch
      %93 = sbr.rel (0) target = $region49
    $region48: #{tpu_custom_call.1} parent=1 // pred_region
      %94 = dma.done [#allocation6], 1024
    $region49: #{tpu_custom_call.1} parent=1 // pred_fallthru
      _
    // Predicated region
    $region50: #{tpu_custom_call.1} parent=1 // pred_check
      _
    $region51: #{tpu_custom_call.1} parent=1 // pred_check_branch
      %96 = sbr.rel (0) target = $region53
    $region52: #{tpu_custom_call.1} parent=1 // pred_region
      %97 = dma.done [#allocation9], 1024
    $region53: #{tpu_custom_call.1} parent=1 // pred_fallthru
      _
    // Predicated region
    $region54: #{tpu_custom_call.1} parent=1 // pred_check
      _
    $region55: #{tpu_custom_call.1} parent=1 // pred_check_branch
      %99 = sbr.rel (0) target = $region57
    $region56: #{tpu_custom_call.1} parent=1 // pred_region
      %100 = dma.done [#allocation9], 1024
    $region57: #{tpu_custom_call.1} parent=1 // pred_fallthru
      _
    %v102 = vld [vmem:[#allocation2] sm:$0xff]
    %v103 = vld [vmem:[#allocation2 + $0x8] sm:$0xff]
    %v104 = vld [vmem:[#allocation2 + $0x10] sm:$0xff]
    %v105 = vld [vmem:[#allocation2 + $0x18] sm:$0xff]
    %v106 = vld [vmem:[#allocation2 + $0x20] sm:$0xff]
    %v107 = vld [vmem:[#allocation2 + $0x28] sm:$0xff]
    %v108 = vld [vmem:[#allocation2 + $0x30] sm:$0xff]
    %v109 = vld [vmem:[#allocation2 + $0x38] sm:$0xff]
    %v110 = vld [vmem:[#allocation2 + $0x40] sm:$0xff]
    %v111 = vld [vmem:[#allocation2 + $0x48] sm:$0xff]
    %v112 = vld [vmem:[#allocation2 + $0x50] sm:$0xff]
    %v113 = vld [vmem:[#allocation2 + $0x58] sm:$0xff]
    %v114 = vld [vmem:[#allocation2 + $0x60] sm:$0xff]
    %v115 = vld [vmem:[#allocation2 + $0x68] sm:$0xff]
    %v116 = vld [vmem:[#allocation2 + $0x70] sm:$0xff]
    %v117 = vld [vmem:[#allocation2 + $0x78] sm:$0xff]
    %v118 = vld [vmem:[#allocation2 + $0x80] sm:$0xff]
    %v119 = vld [vmem:[#allocation2 + $0x88] sm:$0xff]
    %v120 = vld [vmem:[#allocation2 + $0x90] sm:$0xff]
    %v121 = vld [vmem:[#allocation2 + $0x98] sm:$0xff]
    %v122 = vld [vmem:[#allocation2 + $0xa0] sm:$0xff]
    %v123 = vld [vmem:[#allocation2 + $0xa8] sm:$0xff]
    %v124 = vld [vmem:[#allocation2 + $0xb0] sm:$0xff]
    %v125 = vld [vmem:[#allocation2 + $0xb8] sm:$0xff]
    %v126 = vld [vmem:[#allocation2 + $0xc0] sm:$0xff]
    %v127 = vld [vmem:[#allocation2 + $0xc8] sm:$0xff]
    %v128 = vld [vmem:[#allocation2 + $0xd0] sm:$0xff]
    %v129 = vld [vmem:[#allocation2 + $0xd8] sm:$0xff]
    %v130 = vld [vmem:[#allocation2 + $0xe0] sm:$0xff]
    %v131 = vld [vmem:[#allocation2 + $0xe8] sm:$0xff]
    %v132 = vld [vmem:[#allocation2 + $0xf0] sm:$0xff]
    %v133 = vld [vmem:[#allocation2 + $0xf8] sm:$0xff]
    %v134 = vld [vmem:[#allocation5] sm:$0xf]
    %v135 = vld [vmem:[#allocation5 + $0x4] sm:$0xf]
    %v136 = vld [vmem:[#allocation5 + $0x8] sm:$0xf]
    %v137 = vld [vmem:[#allocation5 + $0xc] sm:$0xf]
    %v138 = vld [vmem:[#allocation5 + $0x10] sm:$0xf]
    %v139 = vld [vmem:[#allocation5 + $0x14] sm:$0xf]
    %v140 = vld [vmem:[#allocation5 + $0x18] sm:$0xf]
    %v141 = vld [vmem:[#allocation5 + $0x1c] sm:$0xf]
    %v142 = vld [vmem:[#allocation5 + $0x20] sm:$0xf]
    %v143 = vld [vmem:[#allocation5 + $0x24] sm:$0xf]
    %v144 = vld [vmem:[#allocation5 + $0x28] sm:$0xf]
    %v145 = vld [vmem:[#allocation5 + $0x2c] sm:$0xf]
    %v146 = vld [vmem:[#allocation5 + $0x30] sm:$0xf]
    %v147 = vld [vmem:[#allocation5 + $0x34] sm:$0xf]
    %v148 = vld [vmem:[#allocation5 + $0x38] sm:$0xf]
    %v149 = vld [vmem:[#allocation5 + $0x3c] sm:$0xf]
    %v150 = vld [vmem:[%s2] sm:$0x1]
    %v151 = vpack.c.bf16 %v103, %v102
    %v152 = vpack.c.bf16 %v105, %v104
    %v153 = vpack.c.bf16 %v107, %v106
    %v154 = vpack.c.bf16 %v109, %v108
    %v155 = vpack.c.bf16 %v111, %v110
    %v156 = vpack.c.bf16 %v113, %v112
    %v157 = vpack.c.bf16 %v115, %v114
    %v158 = vpack.c.bf16 %v117, %v116
    %v159 = vpack.c.bf16 %v119, %v118
    %v160 = vpack.c.bf16 %v121, %v120
    %v161 = vpack.c.bf16 %v123, %v122
    %v162 = vpack.c.bf16 %v125, %v124
    %v163 = vpack.c.bf16 %v127, %v126
    %v164 = vpack.c.bf16 %v129, %v128
    %v165 = vpack.c.bf16 %v131, %v130
    %v166 = vpack.c.bf16 %v133, %v132
    %v168 = vlaneseq
    %v169 = vshrl.u32 %v168, 7
    %v170 = vsub.s32 0, %v169
    %v171 = vrot.slane %v150, %v170
    %v189 = vunpack.c.l.b16 %v134
    %v190 = vunpack.c.l.b16 %v135
    %v191 = vunpack.c.l.b16 %v136
    %v192 = vunpack.c.l.b16 %v137
    %v193 = vunpack.c.l.b16 %v138
    %v194 = vunpack.c.l.b16 %v139
    %v195 = vunpack.c.l.b16 %v140
    %v196 = vunpack.c.l.b16 %v141
    %v197 = vunpack.c.l.b16 %v142
    %v198 = vunpack.c.l.b16 %v143
    %v199 = vunpack.c.l.b16 %v144
    %v200 = vunpack.c.l.b16 %v145
    %v201 = vunpack.c.l.b16 %v146
    %v202 = vunpack.c.l.b16 %v147
    %v203 = vunpack.c.l.b16 %v148
    %v204 = vunpack.c.l.b16 %v149
    %v205 = vpack.c.b16 %v190, %v189
    %v206 = vpack.c.b16 %v192, %v191
    %v207 = vpack.c.b16 %v194, %v193
    %v208 = vpack.c.b16 %v196, %v195
    %v209 = vpack.c.b16 %v198, %v197
    %v210 = vpack.c.b16 %v200, %v199
    %v211 = vpack.c.b16 %v202, %v201
    %v212 = vpack.c.b16 %v204, %v203
    %221 = vmatprep.subr.bf16.mxu0 0
    %222 = vmatpush1.bf16.msra.mxu0 %v205
    %223 = vmatprep.subr.bf16.mxu0 0
    %224 = vmatpush1.bf16.msra.mxu0 %v206
    %225 = vmatprep.subr.bf16.mxu0 0
    %226 = vmatpush1.bf16.msra.mxu0 %v207
    %227 = vmatprep.subr.bf16.mxu0 0
    %228 = vmatpush1.bf16.msra.mxu0 %v208
    %229 = vmatprep.subr.bf16.mxu0 0
    %230 = vmatpush1.bf16.msra.mxu0 %v209
    %231 = vmatprep.subr.bf16.mxu0 0
    %232 = vmatpush1.bf16.msra.mxu0 %v210
    %233 = vmatprep.subr.bf16.mxu0 0
    %234 = vmatpush1.bf16.msra.mxu0 %v211
    %235 = vmatprep.subr.bf16.mxu0 0
    %236 = vmatpush1.bf16.msra.mxu0 %v212
    %237 = vmatprep.subr.bf16.mxu0 0
    %238 = vmatpush1.bf16.msra.mxu0 0
    %239 = vmatprep.subr.bf16.mxu0 0
    %240 = vmatpush1.bf16.msra.mxu0 0
    %241 = vmatprep.subr.bf16.mxu0 0
    %242 = vmatpush1.bf16.msra.mxu0 0
    %243 = vmatprep.subr.bf16.mxu0 0
    %244 = vmatpush1.bf16.msra.mxu0 0
    %245 = vmatprep.subr.bf16.mxu0 0
    %246 = vmatpush1.bf16.msra.mxu0 0
    %247 = vmatprep.subr.bf16.mxu0 0
    %248 = vmatpush1.bf16.msra.mxu0 0
    %249 = vmatprep.subr.bf16.mxu0 0
    %250 = vmatpush1.bf16.msra.mxu0 0
    %251 = vmatprep.subr.bf16.mxu0 0
    %252 = vmatpush1.bf16.msra.mxu0 0
    %253 = vmatprep.mubr.bf16.mxu0 0
    %254 = vmatmul.mubr.bf16.gmra.mrb[0].mxu0 %v151
    %v255 = vpop.f32.mrb[0].mxu0
    %v256 = vadd.f32 %v171, %v255
    %v257 = vpop.f32.mrb[0].mxu0
    %v258 = vpop.f32.mrb[0].mxu0
    %v259 = vadd.f32 %v171, %v258
    %v260 = vpop.f32.mrb[0].mxu0
    %261 = vmatprep.mubr.bf16.mxu0 0
    %262 = vmatmul.mubr.bf16.gmra.mrb[0].mxu0 %v152
    %v263 = vpop.f32.mrb[0].mxu0
    %v264 = vadd.f32 %v171, %v263
    %v265 = vpop.f32.mrb[0].mxu0
    %v266 = vpop.f32.mrb[0].mxu0
    %v267 = vadd.f32 %v171, %v266
    %v268 = vpop.f32.mrb[0].mxu0
    %269 = vmatprep.mubr.bf16.mxu0 0
    %270 = vmatmul.mubr.bf16.gmra.mrb[0].mxu0 %v153
    %v271 = vpop.f32.mrb[0].mxu0
    %v272 = vadd.f32 %v171, %v271
    %v273 = vpop.f32.mrb[0].mxu0
    %v274 = vpop.f32.mrb[0].mxu0
    %v275 = vadd.f32 %v171, %v274
    %v276 = vpop.f32.mrb[0].mxu0
    %277 = vmatprep.mubr.bf16.mxu0 0
    %278 = vmatmul.mubr.bf16.gmra.mrb[0].mxu0 %v154
    %v279 = vpop.f32.mrb[0].mxu0
    %v280 = vadd.f32 %v171, %v279
    %v281 = vpop.f32.mrb[0].mxu0
    %v282 = vpop.f32.mrb[0].mxu0
    %v283 = vadd.f32 %v171, %v282
    %v284 = vpop.f32.mrb[0].mxu0
    %285 = vmatprep.mubr.bf16.mxu0 0
    %286 = vmatmul.mubr.bf16.gmra.mrb[0].mxu0 %v155
    %v287 = vpop.f32.mrb[0].mxu0
    %v288 = vadd.f32 %v171, %v287
    %v289 = vpop.f32.mrb[0].mxu0
    %v290 = vpop.f32.mrb[0].mxu0
    %v291 = vadd.f32 %v171, %v290
    %v292 = vpop.f32.mrb[0].mxu0
    %293 = vmatprep.mubr.bf16.mxu0 0
    %294 = vmatmul.mubr.bf16.gmra.mrb[0].mxu0 %v156
    %v295 = vpop.f32.mrb[0].mxu0
    %v296 = vadd.f32 %v171, %v295
    %v297 = vpop.f32.mrb[0].mxu0
    %v298 = vpop.f32.mrb[0].mxu0
    %v299 = vadd.f32 %v171, %v298
    %v300 = vpop.f32.mrb[0].mxu0
    %301 = vmatprep.mubr.bf16.mxu0 0
    %302 = vmatmul.mubr.bf16.gmra.mrb[0].mxu0 %v157
    %v303 = vpop.f32.mrb[0].mxu0
    %v304 = vadd.f32 %v171, %v303
    %v305 = vpop.f32.mrb[0].mxu0
    %v306 = vpop.f32.mrb[0].mxu0
    %v307 = vadd.f32 %v171, %v306
    %v308 = vpop.f32.mrb[0].mxu0
    %309 = vmatprep.mubr.bf16.mxu0 0
    %310 = vmatmul.mubr.bf16.gmra.mrb[0].mxu0 %v158
    %v311 = vpop.f32.mrb[0].mxu0
    %v312 = vadd.f32 %v171, %v311
    %v313 = vpop.f32.mrb[0].mxu0
    %v314 = vpop.f32.mrb[0].mxu0
    %v315 = vadd.f32 %v171, %v314
    %v316 = vpop.f32.mrb[0].mxu0
    %317 = vmatprep.mubr.bf16.mxu0 0
    %318 = vmatmul.mubr.bf16.gmra.mrb[0].mxu0 %v159
    %v319 = vpop.f32.mrb[0].mxu0
    %v320 = vadd.f32 %v171, %v319
    %v321 = vpop.f32.mrb[0].mxu0
    %v322 = vpop.f32.mrb[0].mxu0
    %v323 = vadd.f32 %v171, %v322
    %v324 = vpop.f32.mrb[0].mxu0
    %325 = vmatprep.mubr.bf16.mxu0 0
    %326 = vmatmul.mubr.bf16.gmra.mrb[0].mxu0 %v160
    %v327 = vpop.f32.mrb[0].mxu0
    %v328 = vadd.f32 %v171, %v327
    %v329 = vpop.f32.mrb[0].mxu0
    %v330 = vpop.f32.mrb[0].mxu0
    %v331 = vadd.f32 %v171, %v330
    %v332 = vpop.f32.mrb[0].mxu0
    %333 = vmatprep.mubr.bf16.mxu0 0
    %334 = vmatmul.mubr.bf16.gmra.mrb[0].mxu0 %v161
    %v335 = vpop.f32.mrb[0].mxu0
    %v336 = vadd.f32 %v171, %v335
    %v337 = vpop.f32.mrb[0].mxu0
    %v338 = vpop.f32.mrb[0].mxu0
    %v339 = vadd.f32 %v171, %v338
    %v340 = vpop.f32.mrb[0].mxu0
    %341 = vmatprep.mubr.bf16.mxu0 0
    %342 = vmatmul.mubr.bf16.gmra.mrb[0].mxu0 %v162
    %v343 = vpop.f32.mrb[0].mxu0
    %v344 = vadd.f32 %v171, %v343
    %v345 = vpop.f32.mrb[0].mxu0
    %v346 = vpop.f32.mrb[0].mxu0
    %v347 = vadd.f32 %v171, %v346
    %v348 = vpop.f32.mrb[0].mxu0
    %349 = vmatprep.mubr.bf16.mxu0 0
    %350 = vmatmul.mubr.bf16.gmra.mrb[0].mxu0 %v163
    %v351 = vpop.f32.mrb[0].mxu0
    %v352 = vadd.f32 %v171, %v351
    %v353 = vpop.f32.mrb[0].mxu0
    %v354 = vpop.f32.mrb[0].mxu0
    %v355 = vadd.f32 %v171, %v354
    %v356 = vpop.f32.mrb[0].mxu0
    %357 = vmatprep.mubr.bf16.mxu0 0
    %358 = vmatmul.mubr.bf16.gmra.mrb[0].mxu0 %v164
    %v359 = vpop.f32.mrb[0].mxu0
    %v360 = vadd.f32 %v171, %v359
    %v361 = vpop.f32.mrb[0].mxu0
    %v362 = vpop.f32.mrb[0].mxu0
    %v363 = vadd.f32 %v171, %v362
    %v364 = vpop.f32.mrb[0].mxu0
    %365 = vmatprep.mubr.bf16.mxu0 0
    %366 = vmatmul.mubr.bf16.gmra.mrb[0].mxu0 %v165
    %v367 = vpop.f32.mrb[0].mxu0
    %v368 = vadd.f32 %v171, %v367
    %v369 = vpop.f32.mrb[0].mxu0
    %v370 = vpop.f32.mrb[0].mxu0
    %v371 = vadd.f32 %v171, %v370
    %v372 = vpop.f32.mrb[0].mxu0
    %373 = vmatprep.mubr.bf16.mxu0 0
    %374 = vmatmul.mubr.bf16.gmra.mrb[0].mxu0 %v166
    %v375 = vpop.f32.mrb[0].mxu0
    %v376 = vadd.f32 %v171, %v375
    %v377 = vpop.f32.mrb[0].mxu0
    %v378 = vpop.f32.mrb[0].mxu0
    %v379 = vadd.f32 %v171, %v378
    %v380 = vpop.f32.mrb[0].mxu0
    %381 = vdwg.mxu0
    %v382 = vmax.f32 %v256, 0.0
    %v383 = vmax.f32 %v259, 0.0
    %v384 = vmax.f32 %v264, 0.0
    %v385 = vmax.f32 %v267, 0.0
    %v386 = vmax.f32 %v272, 0.0
    %v387 = vmax.f32 %v275, 0.0
    %v388 = vmax.f32 %v280, 0.0
    %v389 = vmax.f32 %v283, 0.0
    %v390 = vmax.f32 %v288, 0.0
    %v391 = vmax.f32 %v291, 0.0
    %v392 = vmax.f32 %v296, 0.0
    %v393 = vmax.f32 %v299, 0.0
    %v394 = vmax.f32 %v304, 0.0
    %v395 = vmax.f32 %v307, 0.0
    %v396 = vmax.f32 %v312, 0.0
    %v397 = vmax.f32 %v315, 0.0
    %v398 = vmax.f32 %v320, 0.0
    %v399 = vmax.f32 %v323, 0.0
    %v400 = vmax.f32 %v328, 0.0
    %v401 = vmax.f32 %v331, 0.0
    %v402 = vmax.f32 %v336, 0.0
    %v403 = vmax.f32 %v339, 0.0
    %v404 = vmax.f32 %v344, 0.0
    %v405 = vmax.f32 %v347, 0.0
    %v406 = vmax.f32 %v352, 0.0
    %v407 = vmax.f32 %v355, 0.0
    %v408 = vmax.f32 %v360, 0.0
    %v409 = vmax.f32 %v363, 0.0
    %v410 = vmax.f32 %v368, 0.0
    %v411 = vmax.f32 %v371, 0.0
    %v412 = vmax.f32 %v376, 0.0
    %v413 = vmax.f32 %v379, 0.0
    %v414 = vld [vmem:[#allocation7] sm:$0xf]
    %v415 = vld [vmem:[#allocation7 + $0x4] sm:$0xf]
    %v416 = vld [vmem:[#allocation7 + $0x8] sm:$0xf]
    %v417 = vld [vmem:[#allocation7 + $0xc] sm:$0xf]
    %v418 = vld [vmem:[#allocation7 + $0x10] sm:$0xf]
    %v419 = vld [vmem:[#allocation7 + $0x14] sm:$0xf]
    %v420 = vld [vmem:[#allocation7 + $0x18] sm:$0xf]
    %v421 = vld [vmem:[#allocation7 + $0x1c] sm:$0xf]
    %v422 = vld [vmem:[#allocation7 + $0x20] sm:$0xf]
    %v423 = vld [vmem:[#allocation7 + $0x24] sm:$0xf]
    %v424 = vld [vmem:[#allocation7 + $0x28] sm:$0xf]
    %v425 = vld [vmem:[#allocation7 + $0x2c] sm:$0xf]
    %v426 = vld [vmem:[#allocation7 + $0x30] sm:$0xf]
    %v427 = vld [vmem:[#allocation7 + $0x34] sm:$0xf]
    %v428 = vld [vmem:[#allocation7 + $0x38] sm:$0xf]
    %v429 = vld [vmem:[#allocation7 + $0x3c] sm:$0xf]
    %v430 = vld [vmem:[%s4] sm:$0x1]
    %v431 = vpack.c.bf16 %v383, %v382
    %v432 = vpack.c.bf16 %v385, %v384
    %v433 = vpack.c.bf16 %v387, %v386
    %v434 = vpack.c.bf16 %v389, %v388
    %v435 = vpack.c.bf16 %v391, %v390
    %v436 = vpack.c.bf16 %v393, %v392
    %v437 = vpack.c.bf16 %v395, %v394
    %v438 = vpack.c.bf16 %v397, %v396
    %v439 = vpack.c.bf16 %v399, %v398
    %v440 = vpack.c.bf16 %v401, %v400
    %v441 = vpack.c.bf16 %v403, %v402
    %v442 = vpack.c.bf16 %v405, %v404
    %v443 = vpack.c.bf16 %v407, %v406
    %v444 = vpack.c.bf16 %v409, %v408
    %v445 = vpack.c.bf16 %v411, %v410
    %v446 = vpack.c.bf16 %v413, %v412
    %v448 = vlaneseq
    %v449 = vshrl.u32 %v448, 7
    %v450 = vsub.s32 0, %v449
    %v451 = vrot.slane %v430, %v450
    %v469 = vunpack.c.l.b16 %v414
    %v470 = vunpack.c.l.b16 %v415
    %v471 = vunpack.c.l.b16 %v416
    %v472 = vunpack.c.l.b16 %v417
    %v473 = vunpack.c.l.b16 %v418
    %v474 = vunpack.c.l.b16 %v419
    %v475 = vunpack.c.l.b16 %v420
    %v476 = vunpack.c.l.b16 %v421
    %v477 = vunpack.c.l.b16 %v422
    %v478 = vunpack.c.l.b16 %v423
    %v479 = vunpack.c.l.b16 %v424
    %v480 = vunpack.c.l.b16 %v425
    %v481 = vunpack.c.l.b16 %v426
    %v482 = vunpack.c.l.b16 %v427
    %v483 = vunpack.c.l.b16 %v428
    %v484 = vunpack.c.l.b16 %v429
    %v485 = vpack.c.b16 %v470, %v469
    %v486 = vpack.c.b16 %v472, %v471
    %v487 = vpack.c.b16 %v474, %v473
    %v488 = vpack.c.b16 %v476, %v475
    %v489 = vpack.c.b16 %v478, %v477
    %v490 = vpack.c.b16 %v480, %v479
    %v491 = vpack.c.b16 %v482, %v481
    %v492 = vpack.c.b16 %v484, %v483
    %501 = vmatprep.subr.bf16.mxu0 0
    %502 = vmatpush1.bf16.msra.mxu0 %v485
    %503 = vmatprep.subr.bf16.mxu0 0
    %504 = vmatpush1.bf16.msra.mxu0 %v486
    %505 = vmatprep.subr.bf16.mxu0 0
    %506 = vmatpush1.bf16.msra.mxu0 %v487
    %507 = vmatprep.subr.bf16.mxu0 0
    %508 = vmatpush1.bf16.msra.mxu0 %v488
    %509 = vmatprep.subr.bf16.mxu0 0
    %510 = vmatpush1.bf16.msra.mxu0 %v489
    %511 = vmatprep.subr.bf16.mxu0 0
    %512 = vmatpush1.bf16.msra.mxu0 %v490
    %513 = vmatprep.subr.bf16.mxu0 0
    %514 = vmatpush1.bf16.msra.mxu0 %v491
    %515 = vmatprep.subr.bf16.mxu0 0
    %516 = vmatpush1.bf16.msra.mxu0 %v492
    %517 = vmatprep.subr.bf16.mxu0 0
    %518 = vmatpush1.bf16.msra.mxu0 0
    %519 = vmatprep.subr.bf16.mxu0 0
    %520 = vmatpush1.bf16.msra.mxu0 0
    %521 = vmatprep.subr.bf16.mxu0 0
    %522 = vmatpush1.bf16.msra.mxu0 0
    %523 = vmatprep.subr.bf16.mxu0 0
    %524 = vmatpush1.bf16.msra.mxu0 0
    %525 = vmatprep.subr.bf16.mxu0 0
    %526 = vmatpush1.bf16.msra.mxu0 0
    %527 = vmatprep.subr.bf16.mxu0 0
    %528 = vmatpush1.bf16.msra.mxu0 0
    %529 = vmatprep.subr.bf16.mxu0 0
    %530 = vmatpush1.bf16.msra.mxu0 0
    %531 = vmatprep.subr.bf16.mxu0 0
    %532 = vmatpush1.bf16.msra.mxu0 0
    %533 = vmatprep.mubr.bf16.mxu0 0
    %534 = vmatmul.mubr.bf16.gmra.mrb[0].mxu0 %v431
    %v535 = vpop.f32.mrb[0].mxu0
    %v536 = vadd.f32 %v451, %v535
    %v537 = vpop.f32.mrb[0].mxu0
    %v538 = vpop.f32.mrb[0].mxu0
    %v539 = vadd.f32 %v451, %v538
    %v540 = vpop.f32.mrb[0].mxu0
    %541 = vmatprep.mubr.bf16.mxu0 0
    %542 = vmatmul.mubr.bf16.gmra.mrb[0].mxu0 %v432
    %v543 = vpop.f32.mrb[0].mxu0
    %v544 = vadd.f32 %v451, %v543
    %v545 = vpop.f32.mrb[0].mxu0
    %v546 = vpop.f32.mrb[0].mxu0
    %v547 = vadd.f32 %v451, %v546
    %v548 = vpop.f32.mrb[0].mxu0
    %549 = vmatprep.mubr.bf16.mxu0 0
    %550 = vmatmul.mubr.bf16.gmra.mrb[0].mxu0 %v433
    %v551 = vpop.f32.mrb[0].mxu0
    %v552 = vadd.f32 %v451, %v551
    %v553 = vpop.f32.mrb[0].mxu0
    %v554 = vpop.f32.mrb[0].mxu0
    %v555 = vadd.f32 %v451, %v554
    %v556 = vpop.f32.mrb[0].mxu0
    %557 = vmatprep.mubr.bf16.mxu0 0
    %558 = vmatmul.mubr.bf16.gmra.mrb[0].mxu0 %v434
    %v559 = vpop.f32.mrb[0].mxu0
    %v560 = vadd.f32 %v451, %v559
    %v561 = vpop.f32.mrb[0].mxu0
    %v562 = vpop.f32.mrb[0].mxu0
    %v563 = vadd.f32 %v451, %v562
    %v564 = vpop.f32.mrb[0].mxu0
    %565 = vmatprep.mubr.bf16.mxu0 0
    %566 = vmatmul.mubr.bf16.gmra.mrb[0].mxu0 %v435
    %v567 = vpop.f32.mrb[0].mxu0
    %v568 = vadd.f32 %v451, %v567
    %v569 = vpop.f32.mrb[0].mxu0
    %v570 = vpop.f32.mrb[0].mxu0
    %v571 = vadd.f32 %v451, %v570
    %v572 = vpop.f32.mrb[0].mxu0
    %573 = vmatprep.mubr.bf16.mxu0 0
    %574 = vmatmul.mubr.bf16.gmra.mrb[0].mxu0 %v436
    %v575 = vpop.f32.mrb[0].mxu0
    %v576 = vadd.f32 %v451, %v575
    %v577 = vpop.f32.mrb[0].mxu0
    %v578 = vpop.f32.mrb[0].mxu0
    %v579 = vadd.f32 %v451, %v578
    %v580 = vpop.f32.mrb[0].mxu0
    %581 = vmatprep.mubr.bf16.mxu0 0
    %582 = vmatmul.mubr.bf16.gmra.mrb[0].mxu0 %v437
    %v583 = vpop.f32.mrb[0].mxu0
    %v584 = vadd.f32 %v451, %v583
    %v585 = vpop.f32.mrb[0].mxu0
    %v586 = vpop.f32.mrb[0].mxu0
    %v587 = vadd.f32 %v451, %v586
    %v588 = vpop.f32.mrb[0].mxu0
    %589 = vmatprep.mubr.bf16.mxu0 0
    %590 = vmatmul.mubr.bf16.gmra.mrb[0].mxu0 %v438
    %v591 = vpop.f32.mrb[0].mxu0
    %v592 = vadd.f32 %v451, %v591
    %v593 = vpop.f32.mrb[0].mxu0
    %v594 = vpop.f32.mrb[0].mxu0
    %v595 = vadd.f32 %v451, %v594
    %v596 = vpop.f32.mrb[0].mxu0
    %597 = vmatprep.mubr.bf16.mxu0 0
    %598 = vmatmul.mubr.bf16.gmra.mrb[0].mxu0 %v439
    %v599 = vpop.f32.mrb[0].mxu0
    %v600 = vadd.f32 %v451, %v599
    %v601 = vpop.f32.mrb[0].mxu0
    %v602 = vpop.f32.mrb[0].mxu0
    %v603 = vadd.f32 %v451, %v602
    %v604 = vpop.f32.mrb[0].mxu0
    %605 = vmatprep.mubr.bf16.mxu0 0
    %606 = vmatmul.mubr.bf16.gmra.mrb[0].mxu0 %v440
    %v607 = vpop.f32.mrb[0].mxu0
    %v608 = vadd.f32 %v451, %v607
    %v609 = vpop.f32.mrb[0].mxu0
    %v610 = vpop.f32.mrb[0].mxu0
    %v611 = vadd.f32 %v451, %v610
    %v612 = vpop.f32.mrb[0].mxu0
    %613 = vmatprep.mubr.bf16.mxu0 0
    %614 = vmatmul.mubr.bf16.gmra.mrb[0].mxu0 %v441
    %v615 = vpop.f32.mrb[0].mxu0
    %v616 = vadd.f32 %v451, %v615
    %v617 = vpop.f32.mrb[0].mxu0
    %v618 = vpop.f32.mrb[0].mxu0
    %v619 = vadd.f32 %v451, %v618
    %v620 = vpop.f32.mrb[0].mxu0
    %621 = vmatprep.mubr.bf16.mxu0 0
    %622 = vmatmul.mubr.bf16.gmra.mrb[0].mxu0 %v442
    %v623 = vpop.f32.mrb[0].mxu0
    %v624 = vadd.f32 %v451, %v623
    %v625 = vpop.f32.mrb[0].mxu0
    %v626 = vpop.f32.mrb[0].mxu0
    %v627 = vadd.f32 %v451, %v626
    %v628 = vpop.f32.mrb[0].mxu0
    %629 = vmatprep.mubr.bf16.mxu0 0
    %630 = vmatmul.mubr.bf16.gmra.mrb[0].mxu0 %v443
    %v631 = vpop.f32.mrb[0].mxu0
    %v632 = vadd.f32 %v451, %v631
    %v633 = vpop.f32.mrb[0].mxu0
    %v634 = vpop.f32.mrb[0].mxu0
    %v635 = vadd.f32 %v451, %v634
    %v636 = vpop.f32.mrb[0].mxu0
    %637 = vmatprep.mubr.bf16.mxu0 0
    %638 = vmatmul.mubr.bf16.gmra.mrb[0].mxu0 %v444
    %v639 = vpop.f32.mrb[0].mxu0
    %v640 = vadd.f32 %v451, %v639
    %v641 = vpop.f32.mrb[0].mxu0
    %v642 = vpop.f32.mrb[0].mxu0
    %v643 = vadd.f32 %v451, %v642
    %v644 = vpop.f32.mrb[0].mxu0
    %645 = vmatprep.mubr.bf16.mxu0 0
    %646 = vmatmul.mubr.bf16.gmra.mrb[0].mxu0 %v445
    %v647 = vpop.f32.mrb[0].mxu0
    %v648 = vadd.f32 %v451, %v647
    %v649 = vpop.f32.mrb[0].mxu0
    %v650 = vpop.f32.mrb[0].mxu0
    %v651 = vadd.f32 %v451, %v650
    %v652 = vpop.f32.mrb[0].mxu0
    %653 = vmatprep.mubr.bf16.mxu0 0
    %654 = vmatmul.mubr.bf16.gmra.mrb[0].mxu0 %v446
    %v655 = vpop.f32.mrb[0].mxu0
    %v656 = vadd.f32 %v451, %v655
    %v657 = vpop.f32.mrb[0].mxu0
    %v658 = vpop.f32.mrb[0].mxu0
    %v659 = vadd.f32 %v451, %v658
    %v660 = vpop.f32.mrb[0].mxu0
    %661 = vdwg.mxu0
    %v662 = vmax.f32 %v536, 0.0
    %v663 = vmax.f32 %v539, 0.0
    %v664 = vmax.f32 %v544, 0.0
    %v665 = vmax.f32 %v547, 0.0
    %v666 = vmax.f32 %v552, 0.0
    %v667 = vmax.f32 %v555, 0.0
    %v668 = vmax.f32 %v560, 0.0
    %v669 = vmax.f32 %v563, 0.0
    %v670 = vmax.f32 %v568, 0.0
    %v671 = vmax.f32 %v571, 0.0
    %v672 = vmax.f32 %v576, 0.0
    %v673 = vmax.f32 %v579, 0.0
    %v674 = vmax.f32 %v584, 0.0
    %v675 = vmax.f32 %v587, 0.0
    %v676 = vmax.f32 %v592, 0.0
    %v677 = vmax.f32 %v595, 0.0
    %v678 = vmax.f32 %v600, 0.0
    %v679 = vmax.f32 %v603, 0.0
    %v680 = vmax.f32 %v608, 0.0
    %v681 = vmax.f32 %v611, 0.0
    %v682 = vmax.f32 %v616, 0.0
    %v683 = vmax.f32 %v619, 0.0
    %v684 = vmax.f32 %v624, 0.0
    %v685 = vmax.f32 %v627, 0.0
    %v686 = vmax.f32 %v632, 0.0
    %v687 = vmax.f32 %v635, 0.0
    %v688 = vmax.f32 %v640, 0.0
    %v689 = vmax.f32 %v643, 0.0
    %v690 = vmax.f32 %v648, 0.0
    %v691 = vmax.f32 %v651, 0.0
    %v692 = vmax.f32 %v656, 0.0
    %v693 = vmax.f32 %v659, 0.0
    %v694 = vld [vmem:[#allocation8] sm:$0xf]
    %v695 = vld [vmem:[#allocation8 + $0x4] sm:$0xf]
    %v696 = vld [vmem:[#allocation8 + $0x8] sm:$0xf]
    %v697 = vld [vmem:[#allocation8 + $0xc] sm:$0xf]
    %v698 = vld [vmem:[#allocation8 + $0x10] sm:$0xf]
    %v699 = vld [vmem:[#allocation8 + $0x14] sm:$0xf]
    %v700 = vld [vmem:[#allocation8 + $0x18] sm:$0xf]
    %v701 = vld [vmem:[#allocation8 + $0x1c] sm:$0xf]
    %v702 = vld [vmem:[#allocation8 + $0x20] sm:$0xf]
    %v703 = vld [vmem:[#allocation8 + $0x24] sm:$0xf]
    %v704 = vld [vmem:[#allocation8 + $0x28] sm:$0xf]
    %v705 = vld [vmem:[#allocation8 + $0x2c] sm:$0xf]
    %v706 = vld [vmem:[#allocation8 + $0x30] sm:$0xf]
    %v707 = vld [vmem:[#allocation8 + $0x34] sm:$0xf]
    %v708 = vld [vmem:[#allocation8 + $0x38] sm:$0xf]
    %v709 = vld [vmem:[#allocation8 + $0x3c] sm:$0xf]
    %v710 = vld [vmem:[%s6] sm:$0x1]
    %v711 = vpack.c.bf16 %v663, %v662
    %v712 = vpack.c.bf16 %v665, %v664
    %v713 = vpack.c.bf16 %v667, %v666
    %v714 = vpack.c.bf16 %v669, %v668
    %v715 = vpack.c.bf16 %v671, %v670
    %v716 = vpack.c.bf16 %v673, %v672
    %v717 = vpack.c.bf16 %v675, %v674
    %v718 = vpack.c.bf16 %v677, %v676
    %v719 = vpack.c.bf16 %v679, %v678
    %v720 = vpack.c.bf16 %v681, %v680
    %v721 = vpack.c.bf16 %v683, %v682
    %v722 = vpack.c.bf16 %v685, %v684
    %v723 = vpack.c.bf16 %v687, %v686
    %v724 = vpack.c.bf16 %v689, %v688
    %v725 = vpack.c.bf16 %v691, %v690
    %v726 = vpack.c.bf16 %v693, %v692
    %v728 = vlaneseq
    %v729 = vshrl.u32 %v728, 7
    %v730 = vsub.s32 0, %v729
    %v731 = vrot.slane %v710, %v730
    %v749 = vunpack.c.l.b16 %v694
    %v750 = vunpack.c.l.b16 %v695
    %v751 = vunpack.c.l.b16 %v696
    %v752 = vunpack.c.l.b16 %v697
    %v753 = vunpack.c.l.b16 %v698
    %v754 = vunpack.c.l.b16 %v699
    %v755 = vunpack.c.l.b16 %v700
    %v756 = vunpack.c.l.b16 %v701
    %v757 = vunpack.c.l.b16 %v702
    %v758 = vunpack.c.l.b16 %v703
    %v759 = vunpack.c.l.b16 %v704
    %v760 = vunpack.c.l.b16 %v705
    %v761 = vunpack.c.l.b16 %v706
    %v762 = vunpack.c.l.b16 %v707
    %v763 = vunpack.c.l.b16 %v708
    %v764 = vunpack.c.l.b16 %v709
    %v765 = vpack.c.b16 %v750, %v749
    %v766 = vpack.c.b16 %v752, %v751
    %v767 = vpack.c.b16 %v754, %v753
    %v768 = vpack.c.b16 %v756, %v755
    %v769 = vpack.c.b16 %v758, %v757
    %v770 = vpack.c.b16 %v760, %v759
    %v771 = vpack.c.b16 %v762, %v761
    %v772 = vpack.c.b16 %v764, %v763
    %781 = vmatprep.subr.bf16.mxu0 0
    %782 = vmatpush1.bf16.msra.mxu0 %v765
    %783 = vmatprep.subr.bf16.mxu0 0
    %784 = vmatpush1.bf16.msra.mxu0 %v766
    %785 = vmatprep.subr.bf16.mxu0 0
    %786 = vmatpush1.bf16.msra.mxu0 %v767
    %787 = vmatprep.subr.bf16.mxu0 0
    %788 = vmatpush1.bf16.msra.mxu0 %v768
    %789 = vmatprep.subr.bf16.mxu0 0
    %790 = vmatpush1.bf16.msra.mxu0 %v769
    %791 = vmatprep.subr.bf16.mxu0 0
    %792 = vmatpush1.bf16.msra.mxu0 %v770
    %793 = vmatprep.subr.bf16.mxu0 0
    %794 = vmatpush1.bf16.msra.mxu0 %v771
    %795 = vmatprep.subr.bf16.mxu0 0
    %796 = vmatpush1.bf16.msra.mxu0 %v772
    %797 = vmatprep.subr.bf16.mxu0 0
    %798 = vmatpush1.bf16.msra.mxu0 0
    %799 = vmatprep.subr.bf16.mxu0 0
    %800 = vmatpush1.bf16.msra.mxu0 0
    %801 = vmatprep.subr.bf16.mxu0 0
    %802 = vmatpush1.bf16.msra.mxu0 0
    %803 = vmatprep.subr.bf16.mxu0 0
    %804 = vmatpush1.bf16.msra.mxu0 0
    %805 = vmatprep.subr.bf16.mxu0 0
    %806 = vmatpush1.bf16.msra.mxu0 0
    %807 = vmatprep.subr.bf16.mxu0 0
    %808 = vmatpush1.bf16.msra.mxu0 0
    %809 = vmatprep.subr.bf16.mxu0 0
    %810 = vmatpush1.bf16.msra.mxu0 0
    %811 = vmatprep.subr.bf16.mxu0 0
    %812 = vmatpush1.bf16.msra.mxu0 0
    %813 = vmatprep.mubr.bf16.mxu0 0
    %814 = vmatmul.mubr.bf16.gmra.mrb[0].mxu0 %v711
    %v815 = vpop.f32.mrb[0].mxu0
    %v816 = vadd.f32 %v731, %v815
    %v817 = vpop.f32.mrb[0].mxu0
    %v818 = vpop.f32.mrb[0].mxu0
    %v819 = vadd.f32 %v731, %v818
    %v820 = vpop.f32.mrb[0].mxu0
    %821 = vmatprep.mubr.bf16.mxu0 0
    %822 = vmatmul.mubr.bf16.gmra.mrb[0].mxu0 %v712
    %v823 = vpop.f32.mrb[0].mxu0
    %v824 = vadd.f32 %v731, %v823
    %v825 = vpop.f32.mrb[0].mxu0
    %v826 = vpop.f32.mrb[0].mxu0
    %v827 = vadd.f32 %v731, %v826
    %v828 = vpop.f32.mrb[0].mxu0
    %829 = vmatprep.mubr.bf16.mxu0 0
    %830 = vmatmul.mubr.bf16.gmra.mrb[0].mxu0 %v713
    %v831 = vpop.f32.mrb[0].mxu0
    %v832 = vadd.f32 %v731, %v831
    %v833 = vpop.f32.mrb[0].mxu0
    %v834 = vpop.f32.mrb[0].mxu0
    %v835 = vadd.f32 %v731, %v834
    %v836 = vpop.f32.mrb[0].mxu0
    %837 = vmatprep.mubr.bf16.mxu0 0
    %838 = vmatmul.mubr.bf16.gmra.mrb[0].mxu0 %v714
    %v839 = vpop.f32.mrb[0].mxu0
    %v840 = vadd.f32 %v731, %v839
    %v841 = vpop.f32.mrb[0].mxu0
    %v842 = vpop.f32.mrb[0].mxu0
    %v843 = vadd.f32 %v731, %v842
    %v844 = vpop.f32.mrb[0].mxu0
    %845 = vmatprep.mubr.bf16.mxu0 0
    %846 = vmatmul.mubr.bf16.gmra.mrb[0].mxu0 %v715
    %v847 = vpop.f32.mrb[0].mxu0
    %v848 = vadd.f32 %v731, %v847
    %v849 = vpop.f32.mrb[0].mxu0
    %v850 = vpop.f32.mrb[0].mxu0
    %v851 = vadd.f32 %v731, %v850
    %v852 = vpop.f32.mrb[0].mxu0
    %853 = vmatprep.mubr.bf16.mxu0 0
    %854 = vmatmul.mubr.bf16.gmra.mrb[0].mxu0 %v716
    %v855 = vpop.f32.mrb[0].mxu0
    %v856 = vadd.f32 %v731, %v855
    %v857 = vpop.f32.mrb[0].mxu0
    %v858 = vpop.f32.mrb[0].mxu0
    %v859 = vadd.f32 %v731, %v858
    %v860 = vpop.f32.mrb[0].mxu0
    %861 = vmatprep.mubr.bf16.mxu0 0
    %862 = vmatmul.mubr.bf16.gmra.mrb[0].mxu0 %v717
    %v863 = vpop.f32.mrb[0].mxu0
    %v864 = vadd.f32 %v731, %v863
    %v865 = vpop.f32.mrb[0].mxu0
    %v866 = vpop.f32.mrb[0].mxu0
    %v867 = vadd.f32 %v731, %v866
    %v868 = vpop.f32.mrb[0].mxu0
    %869 = vmatprep.mubr.bf16.mxu0 0
    %870 = vmatmul.mubr.bf16.gmra.mrb[0].mxu0 %v718
    %v871 = vpop.f32.mrb[0].mxu0
    %v872 = vadd.f32 %v731, %v871
    %v873 = vpop.f32.mrb[0].mxu0
    %v874 = vpop.f32.mrb[0].mxu0
    %v875 = vadd.f32 %v731, %v874
    %v876 = vpop.f32.mrb[0].mxu0
    %877 = vmatprep.mubr.bf16.mxu0 0
    %878 = vmatmul.mubr.bf16.gmra.mrb[0].mxu0 %v719
    %v879 = vpop.f32.mrb[0].mxu0
    %v880 = vadd.f32 %v731, %v879
    %v881 = vpop.f32.mrb[0].mxu0
    %v882 = vpop.f32.mrb[0].mxu0
    %v883 = vadd.f32 %v731, %v882
    %v884 = vpop.f32.mrb[0].mxu0
    %885 = vmatprep.mubr.bf16.mxu0 0
    %886 = vmatmul.mubr.bf16.gmra.mrb[0].mxu0 %v720
    %v887 = vpop.f32.mrb[0].mxu0
    %v888 = vadd.f32 %v731, %v887
    %v889 = vpop.f32.mrb[0].mxu0
    %v890 = vpop.f32.mrb[0].mxu0
    %v891 = vadd.f32 %v731, %v890
    %v892 = vpop.f32.mrb[0].mxu0
    %893 = vmatprep.mubr.bf16.mxu0 0
    %894 = vmatmul.mubr.bf16.gmra.mrb[0].mxu0 %v721
    %v895 = vpop.f32.mrb[0].mxu0
    %v896 = vadd.f32 %v731, %v895
    %v897 = vpop.f32.mrb[0].mxu0
    %v898 = vpop.f32.mrb[0].mxu0
    %v899 = vadd.f32 %v731, %v898
    %v900 = vpop.f32.mrb[0].mxu0
    %901 = vmatprep.mubr.bf16.mxu0 0
    %902 = vmatmul.mubr.bf16.gmra.mrb[0].mxu0 %v722
    %v903 = vpop.f32.mrb[0].mxu0
    %v904 = vadd.f32 %v731, %v903
    %v905 = vpop.f32.mrb[0].mxu0
    %v906 = vpop.f32.mrb[0].mxu0
    %v907 = vadd.f32 %v731, %v906
    %v908 = vpop.f32.mrb[0].mxu0
    %909 = vmatprep.mubr.bf16.mxu0 0
    %910 = vmatmul.mubr.bf16.gmra.mrb[0].mxu0 %v723
    %v911 = vpop.f32.mrb[0].mxu0
    %v912 = vadd.f32 %v731, %v911
    %v913 = vpop.f32.mrb[0].mxu0
    %v914 = vpop.f32.mrb[0].mxu0
    %v915 = vadd.f32 %v731, %v914
    %v916 = vpop.f32.mrb[0].mxu0
    %917 = vmatprep.mubr.bf16.mxu0 0
    %918 = vmatmul.mubr.bf16.gmra.mrb[0].mxu0 %v724
    %v919 = vpop.f32.mrb[0].mxu0
    %v920 = vadd.f32 %v731, %v919
    %v921 = vpop.f32.mrb[0].mxu0
    %v922 = vpop.f32.mrb[0].mxu0
    %v923 = vadd.f32 %v731, %v922
    %v924 = vpop.f32.mrb[0].mxu0
    %925 = vmatprep.mubr.bf16.mxu0 0
    %926 = vmatmul.mubr.bf16.gmra.mrb[0].mxu0 %v725
    %v927 = vpop.f32.mrb[0].mxu0
    %v928 = vadd.f32 %v731, %v927
    %v929 = vpop.f32.mrb[0].mxu0
    %v930 = vpop.f32.mrb[0].mxu0
    %v931 = vadd.f32 %v731, %v930
    %v932 = vpop.f32.mrb[0].mxu0
    %933 = vmatprep.mubr.bf16.mxu0 0
    %934 = vmatmul.mubr.bf16.gmra.mrb[0].mxu0 %v726
    %v935 = vpop.f32.mrb[0].mxu0
    %v936 = vadd.f32 %v731, %v935
    %v937 = vpop.f32.mrb[0].mxu0
    %v938 = vpop.f32.mrb[0].mxu0
    %v939 = vadd.f32 %v731, %v938
    %v940 = vpop.f32.mrb[0].mxu0
    %941 = vdwg.mxu0
    %v942 = vmax.f32 %v816, 0.0
    %v943 = vmax.f32 %v819, 0.0
    %v944 = vmax.f32 %v824, 0.0
    %v945 = vmax.f32 %v827, 0.0
    %v946 = vmax.f32 %v832, 0.0
    %v947 = vmax.f32 %v835, 0.0
    %v948 = vmax.f32 %v840, 0.0
    %v949 = vmax.f32 %v843, 0.0
    %v950 = vmax.f32 %v848, 0.0
    %v951 = vmax.f32 %v851, 0.0
    %v952 = vmax.f32 %v856, 0.0
    %v953 = vmax.f32 %v859, 0.0
    %v954 = vmax.f32 %v864, 0.0
    %v955 = vmax.f32 %v867, 0.0
    %v956 = vmax.f32 %v872, 0.0
    %v957 = vmax.f32 %v875, 0.0
    %v958 = vmax.f32 %v880, 0.0
    %v959 = vmax.f32 %v883, 0.0
    %v960 = vmax.f32 %v888, 0.0
    %v961 = vmax.f32 %v891, 0.0
    %v962 = vmax.f32 %v896, 0.0
    %v963 = vmax.f32 %v899, 0.0
    %v964 = vmax.f32 %v904, 0.0
    %v965 = vmax.f32 %v907, 0.0
    %v966 = vmax.f32 %v912, 0.0
    %v967 = vmax.f32 %v915, 0.0
    %v968 = vmax.f32 %v920, 0.0
    %v969 = vmax.f32 %v923, 0.0
    %v970 = vmax.f32 %v928, 0.0
    %v971 = vmax.f32 %v931, 0.0
    %v972 = vmax.f32 %v936, 0.0
    %v973 = vmax.f32 %v939, 0.0
    %v974 = vld [vmem:[#allocation10] sm:$0xf]
    %v975 = vld [vmem:[#allocation10 + $0x4] sm:$0xf]
    %v976 = vld [vmem:[#allocation10 + $0x8] sm:$0xf]
    %v977 = vld [vmem:[#allocation10 + $0xc] sm:$0xf]
    %v978 = vld [vmem:[#allocation10 + $0x10] sm:$0xf]
    %v979 = vld [vmem:[#allocation10 + $0x14] sm:$0xf]
    %v980 = vld [vmem:[#allocation10 + $0x18] sm:$0xf]
    %v981 = vld [vmem:[#allocation10 + $0x1c] sm:$0xf]
    %v982 = vld [vmem:[#allocation10 + $0x20] sm:$0xf]
    %v983 = vld [vmem:[#allocation10 + $0x24] sm:$0xf]
    %v984 = vld [vmem:[#allocation10 + $0x28] sm:$0xf]
    %v985 = vld [vmem:[#allocation10 + $0x2c] sm:$0xf]
    %v986 = vld [vmem:[#allocation10 + $0x30] sm:$0xf]
    %v987 = vld [vmem:[#allocation10 + $0x34] sm:$0xf]
    %v988 = vld [vmem:[#allocation10 + $0x38] sm:$0xf]
    %v989 = vld [vmem:[#allocation10 + $0x3c] sm:$0xf]
    %v990 = vld [vmem:[%s8] sm:$0x1]
    %v991 = vpack.c.bf16 %v943, %v942
    %v992 = vpack.c.bf16 %v945, %v944
    %v993 = vpack.c.bf16 %v947, %v946
    %v994 = vpack.c.bf16 %v949, %v948
    %v995 = vpack.c.bf16 %v951, %v950
    %v996 = vpack.c.bf16 %v953, %v952
    %v997 = vpack.c.bf16 %v955, %v954
    %v998 = vpack.c.bf16 %v957, %v956
    %v999 = vpack.c.bf16 %v959, %v958
    %v1000 = vpack.c.bf16 %v961, %v960
    %v1001 = vpack.c.bf16 %v963, %v962
    %v1002 = vpack.c.bf16 %v965, %v964
    %v1003 = vpack.c.bf16 %v967, %v966
    %v1004 = vpack.c.bf16 %v969, %v968
    %v1005 = vpack.c.bf16 %v971, %v970
    %v1006 = vpack.c.bf16 %v973, %v972
    %v1008 = vlaneseq
    %v1009 = vshrl.u32 %v1008, 7
    %v1010 = vsub.s32 0, %v1009
    %v1011 = vrot.slane %v990, %v1010
    %v1029 = vunpack.c.l.b16 %v974
    %v1030 = vunpack.c.l.b16 %v975
    %v1031 = vunpack.c.l.b16 %v976
    %v1032 = vunpack.c.l.b16 %v977
    %v1033 = vunpack.c.l.b16 %v978
    %v1034 = vunpack.c.l.b16 %v979
    %v1035 = vunpack.c.l.b16 %v980
    %v1036 = vunpack.c.l.b16 %v981
    %v1037 = vunpack.c.l.b16 %v982
    %v1038 = vunpack.c.l.b16 %v983
    %v1039 = vunpack.c.l.b16 %v984
    %v1040 = vunpack.c.l.b16 %v985
    %v1041 = vunpack.c.l.b16 %v986
    %v1042 = vunpack.c.l.b16 %v987
    %v1043 = vunpack.c.l.b16 %v988
    %v1044 = vunpack.c.l.b16 %v989
    %v1045 = vpack.c.b16 %v1030, %v1029
    %v1046 = vpack.c.b16 %v1032, %v1031
    %v1047 = vpack.c.b16 %v1034, %v1033
    %v1048 = vpack.c.b16 %v1036, %v1035
    %v1049 = vpack.c.b16 %v1038, %v1037
    %v1050 = vpack.c.b16 %v1040, %v1039
    %v1051 = vpack.c.b16 %v1042, %v1041
    %v1052 = vpack.c.b16 %v1044, %v1043
    %1061 = vmatprep.subr.bf16.mxu0 0
    %1062 = vmatpush1.bf16.msra.mxu0 %v1045
    %1063 = vmatprep.subr.bf16.mxu0 0
    %1064 = vmatpush1.bf16.msra.mxu0 %v1046
    %1065 = vmatprep.subr.bf16.mxu0 0
    %1066 = vmatpush1.bf16.msra.mxu0 %v1047
    %1067 = vmatprep.subr.bf16.mxu0 0
    %1068 = vmatpush1.bf16.msra.mxu0 %v1048
    %1069 = vmatprep.subr.bf16.mxu0 0
    %1070 = vmatpush1.bf16.msra.mxu0 %v1049
    %1071 = vmatprep.subr.bf16.mxu0 0
    %1072 = vmatpush1.bf16.msra.mxu0 %v1050
    %1073 = vmatprep.subr.bf16.mxu0 0
    %1074 = vmatpush1.bf16.msra.mxu0 %v1051
    %1075 = vmatprep.subr.bf16.mxu0 0
    %1076 = vmatpush1.bf16.msra.mxu0 %v1052
    %1077 = vmatprep.subr.bf16.mxu0 0
    %1078 = vmatpush1.bf16.msra.mxu0 0
    %1079 = vmatprep.subr.bf16.mxu0 0
    %1080 = vmatpush1.bf16.msra.mxu0 0
    %1081 = vmatprep.subr.bf16.mxu0 0
    %1082 = vmatpush1.bf16.msra.mxu0 0
    %1083 = vmatprep.subr.bf16.mxu0 0
    %1084 = vmatpush1.bf16.msra.mxu0 0
    %1085 = vmatprep.subr.bf16.mxu0 0
    %1086 = vmatpush1.bf16.msra.mxu0 0
    %1087 = vmatprep.subr.bf16.mxu0 0
    %1088 = vmatpush1.bf16.msra.mxu0 0
    %1089 = vmatprep.subr.bf16.mxu0 0
    %1090 = vmatpush1.bf16.msra.mxu0 0
    %1091 = vmatprep.subr.bf16.mxu0 0
    %1092 = vmatpush1.bf16.msra.mxu0 0
    %1093 = vmatprep.mubr.bf16.mxu0 0
    %1094 = vmatmul.mubr.bf16.gmra.mrb[0].mxu0 %v991
    %v1095 = vpop.f32.mrb[0].mxu0
    %v1096 = vadd.f32 %v1011, %v1095
    %v1097 = vpop.f32.mrb[0].mxu0
    %v1098 = vpop.f32.mrb[0].mxu0
    %v1099 = vadd.f32 %v1011, %v1098
    %v1100 = vpop.f32.mrb[0].mxu0
    %1101 = vmatprep.mubr.bf16.mxu0 0
    %1102 = vmatmul.mubr.bf16.gmra.mrb[0].mxu0 %v992
    %v1103 = vpop.f32.mrb[0].mxu0
    %v1104 = vadd.f32 %v1011, %v1103
    %v1105 = vpop.f32.mrb[0].mxu0
    %v1106 = vpop.f32.mrb[0].mxu0
    %v1107 = vadd.f32 %v1011, %v1106
    %v1108 = vpop.f32.mrb[0].mxu0
    %1109 = vmatprep.mubr.bf16.mxu0 0
    %1110 = vmatmul.mubr.bf16.gmra.mrb[0].mxu0 %v993
    %v1111 = vpop.f32.mrb[0].mxu0
    %v1112 = vadd.f32 %v1011, %v1111
    %v1113 = vpop.f32.mrb[0].mxu0
    %v1114 = vpop.f32.mrb[0].mxu0
    %v1115 = vadd.f32 %v1011, %v1114
    %v1116 = vpop.f32.mrb[0].mxu0
    %1117 = vmatprep.mubr.bf16.mxu0 0
    %1118 = vmatmul.mubr.bf16.gmra.mrb[0].mxu0 %v994
    %v1119 = vpop.f32.mrb[0].mxu0
    %v1120 = vadd.f32 %v1011, %v1119
    %v1121 = vpop.f32.mrb[0].mxu0
    %v1122 = vpop.f32.mrb[0].mxu0
    %v1123 = vadd.f32 %v1011, %v1122
    %v1124 = vpop.f32.mrb[0].mxu0
    %1125 = vmatprep.mubr.bf16.mxu0 0
    %1126 = vmatmul.mubr.bf16.gmra.mrb[0].mxu0 %v995
    %v1127 = vpop.f32.mrb[0].mxu0
    %v1128 = vadd.f32 %v1011, %v1127
    %v1129 = vpop.f32.mrb[0].mxu0
    %v1130 = vpop.f32.mrb[0].mxu0
    %v1131 = vadd.f32 %v1011, %v1130
    %v1132 = vpop.f32.mrb[0].mxu0
    %1133 = vmatprep.mubr.bf16.mxu0 0
    %1134 = vmatmul.mubr.bf16.gmra.mrb[0].mxu0 %v996
    %v1135 = vpop.f32.mrb[0].mxu0
    %v1136 = vadd.f32 %v1011, %v1135
    %v1137 = vpop.f32.mrb[0].mxu0
    %v1138 = vpop.f32.mrb[0].mxu0
    %v1139 = vadd.f32 %v1011, %v1138
    %v1140 = vpop.f32.mrb[0].mxu0
    %1141 = vmatprep.mubr.bf16.mxu0 0
    %1142 = vmatmul.mubr.bf16.gmra.mrb[0].mxu0 %v997
    %v1143 = vpop.f32.mrb[0].mxu0
    %v1144 = vadd.f32 %v1011, %v1143
    %v1145 = vpop.f32.mrb[0].mxu0
    %v1146 = vpop.f32.mrb[0].mxu0
    %v1147 = vadd.f32 %v1011, %v1146
    %v1148 = vpop.f32.mrb[0].mxu0
    %1149 = vmatprep.mubr.bf16.mxu0 0
    %1150 = vmatmul.mubr.bf16.gmra.mrb[0].mxu0 %v998
    %v1151 = vpop.f32.mrb[0].mxu0
    %v1152 = vadd.f32 %v1011, %v1151
    %v1153 = vpop.f32.mrb[0].mxu0
    %v1154 = vpop.f32.mrb[0].mxu0
    %v1155 = vadd.f32 %v1011, %v1154
    %v1156 = vpop.f32.mrb[0].mxu0
    %1157 = vmatprep.mubr.bf16.mxu0 0
    %1158 = vmatmul.mubr.bf16.gmra.mrb[0].mxu0 %v999
    %v1159 = vpop.f32.mrb[0].mxu0
    %v1160 = vadd.f32 %v1011, %v1159
    %v1161 = vpop.f32.mrb[0].mxu0
    %v1162 = vpop.f32.mrb[0].mxu0
    %v1163 = vadd.f32 %v1011, %v1162
    %v1164 = vpop.f32.mrb[0].mxu0
    %1165 = vmatprep.mubr.bf16.mxu0 0
    %1166 = vmatmul.mubr.bf16.gmra.mrb[0].mxu0 %v1000
    %v1167 = vpop.f32.mrb[0].mxu0
    %v1168 = vadd.f32 %v1011, %v1167
    %v1169 = vpop.f32.mrb[0].mxu0
    %v1170 = vpop.f32.mrb[0].mxu0
    %v1171 = vadd.f32 %v1011, %v1170
    %v1172 = vpop.f32.mrb[0].mxu0
    %1173 = vmatprep.mubr.bf16.mxu0 0
    %1174 = vmatmul.mubr.bf16.gmra.mrb[0].mxu0 %v1001
    %v1175 = vpop.f32.mrb[0].mxu0
    %v1176 = vadd.f32 %v1011, %v1175
    %v1177 = vpop.f32.mrb[0].mxu0
    %v1178 = vpop.f32.mrb[0].mxu0
    %v1179 = vadd.f32 %v1011, %v1178
    %v1180 = vpop.f32.mrb[0].mxu0
    %1181 = vmatprep.mubr.bf16.mxu0 0
    %1182 = vmatmul.mubr.bf16.gmra.mrb[0].mxu0 %v1002
    %v1183 = vpop.f32.mrb[0].mxu0
    %v1184 = vadd.f32 %v1011, %v1183
    %v1185 = vpop.f32.mrb[0].mxu0
    %v1186 = vpop.f32.mrb[0].mxu0
    %v1187 = vadd.f32 %v1011, %v1186
    %v1188 = vpop.f32.mrb[0].mxu0
    %1189 = vmatprep.mubr.bf16.mxu0 0
    %1190 = vmatmul.mubr.bf16.gmra.mrb[0].mxu0 %v1003
    %v1191 = vpop.f32.mrb[0].mxu0
    %v1192 = vadd.f32 %v1011, %v1191
    %v1193 = vpop.f32.mrb[0].mxu0
    %v1194 = vpop.f32.mrb[0].mxu0
    %v1195 = vadd.f32 %v1011, %v1194
    %v1196 = vpop.f32.mrb[0].mxu0
    %1197 = vmatprep.mubr.bf16.mxu0 0
    %1198 = vmatmul.mubr.bf16.gmra.mrb[0].mxu0 %v1004
    %v1199 = vpop.f32.mrb[0].mxu0
    %v1200 = vadd.f32 %v1011, %v1199
    %v1201 = vpop.f32.mrb[0].mxu0
    %v1202 = vpop.f32.mrb[0].mxu0
    %v1203 = vadd.f32 %v1011, %v1202
    %v1204 = vpop.f32.mrb[0].mxu0
    %1205 = vmatprep.mubr.bf16.mxu0 0
    %1206 = vmatmul.mubr.bf16.gmra.mrb[0].mxu0 %v1005
    %v1207 = vpop.f32.mrb[0].mxu0
    %v1208 = vadd.f32 %v1011, %v1207
    %v1209 = vpop.f32.mrb[0].mxu0
    %v1210 = vpop.f32.mrb[0].mxu0
    %v1211 = vadd.f32 %v1011, %v1210
    %v1212 = vpop.f32.mrb[0].mxu0
    %1213 = vmatprep.mubr.bf16.mxu0 0
    %1214 = vmatmul.mubr.bf16.gmra.mrb[0].mxu0 %v1006
    %v1215 = vpop.f32.mrb[0].mxu0
    %v1216 = vadd.f32 %v1011, %v1215
    %v1217 = vpop.f32.mrb[0].mxu0
    %v1218 = vpop.f32.mrb[0].mxu0
    %v1219 = vadd.f32 %v1011, %v1218
    %v1220 = vpop.f32.mrb[0].mxu0
    %1221 = vdwg.mxu0
    %v1222 = vmax.f32 %v1096, 0.0
    %v1223 = vmax.f32 %v1099, 0.0
    %v1224 = vmax.f32 %v1104, 0.0
    %v1225 = vmax.f32 %v1107, 0.0
    %v1226 = vmax.f32 %v1112, 0.0
    %v1227 = vmax.f32 %v1115, 0.0
    %v1228 = vmax.f32 %v1120, 0.0
    %v1229 = vmax.f32 %v1123, 0.0
    %v1230 = vmax.f32 %v1128, 0.0
    %v1231 = vmax.f32 %v1131, 0.0
    %v1232 = vmax.f32 %v1136, 0.0
    %v1233 = vmax.f32 %v1139, 0.0
    %v1234 = vmax.f32 %v1144, 0.0
    %v1235 = vmax.f32 %v1147, 0.0
    %v1236 = vmax.f32 %v1152, 0.0
    %v1237 = vmax.f32 %v1155, 0.0
    %v1238 = vmax.f32 %v1160, 0.0
    %v1239 = vmax.f32 %v1163, 0.0
    %v1240 = vmax.f32 %v1168, 0.0
    %v1241 = vmax.f32 %v1171, 0.0
    %v1242 = vmax.f32 %v1176, 0.0
    %v1243 = vmax.f32 %v1179, 0.0
    %v1244 = vmax.f32 %v1184, 0.0
    %v1245 = vmax.f32 %v1187, 0.0
    %v1246 = vmax.f32 %v1192, 0.0
    %v1247 = vmax.f32 %v1195, 0.0
    %v1248 = vmax.f32 %v1200, 0.0
    %v1249 = vmax.f32 %v1203, 0.0
    %v1250 = vmax.f32 %v1208, 0.0
    %v1251 = vmax.f32 %v1211, 0.0
    %v1252 = vmax.f32 %v1216, 0.0
    %v1253 = vmax.f32 %v1219, 0.0
    %1254 = vst [vmem:[#allocation11] sm:$0xff] %v1222
    %1255 = vst [vmem:[#allocation11 + $0x8] sm:$0xff] %v1223
    %1256 = vst [vmem:[#allocation11 + $0x10] sm:$0xff] %v1224
    %1257 = vst [vmem:[#allocation11 + $0x18] sm:$0xff] %v1225
    %1258 = vst [vmem:[#allocation11 + $0x20] sm:$0xff] %v1226
    %1259 = vst [vmem:[#allocation11 + $0x28] sm:$0xff] %v1227
    %1260 = vst [vmem:[#allocation11 + $0x30] sm:$0xff] %v1228
    %1261 = vst [vmem:[#allocation11 + $0x38] sm:$0xff] %v1229
    %1262 = vst [vmem:[#allocation11 + $0x40] sm:$0xff] %v1230
    %1263 = vst [vmem:[#allocation11 + $0x48] sm:$0xff] %v1231
    %1264 = vst [vmem:[#allocation11 + $0x50] sm:$0xff] %v1232
    %1265 = vst [vmem:[#allocation11 + $0x58] sm:$0xff] %v1233
    %1266 = vst [vmem:[#allocation11 + $0x60] sm:$0xff] %v1234
    %1267 = vst [vmem:[#allocation11 + $0x68] sm:$0xff] %v1235
    %1268 = vst [vmem:[#allocation11 + $0x70] sm:$0xff] %v1236
    %1269 = vst [vmem:[#allocation11 + $0x78] sm:$0xff] %v1237
    %1270 = vst [vmem:[#allocation11 + $0x80] sm:$0xff] %v1238
    %1271 = vst [vmem:[#allocation11 + $0x88] sm:$0xff] %v1239
    %1272 = vst [vmem:[#allocation11 + $0x90] sm:$0xff] %v1240
    %1273 = vst [vmem:[#allocation11 + $0x98] sm:$0xff] %v1241
    %1274 = vst [vmem:[#allocation11 + $0xa0] sm:$0xff] %v1242
    %1275 = vst [vmem:[#allocation11 + $0xa8] sm:$0xff] %v1243
    %1276 = vst [vmem:[#allocation11 + $0xb0] sm:$0xff] %v1244
    %1277 = vst [vmem:[#allocation11 + $0xb8] sm:$0xff] %v1245
    %1278 = vst [vmem:[#allocation11 + $0xc0] sm:$0xff] %v1246
    %1279 = vst [vmem:[#allocation11 + $0xc8] sm:$0xff] %v1247
    %1280 = vst [vmem:[#allocation11 + $0xd0] sm:$0xff] %v1248
    %1281 = vst [vmem:[#allocation11 + $0xd8] sm:$0xff] %v1249
    %1282 = vst [vmem:[#allocation11 + $0xe0] sm:$0xff] %v1250
    %1283 = vst [vmem:[#allocation11 + $0xe8] sm:$0xff] %v1251
    %1284 = vst [vmem:[#allocation11 + $0xf0] sm:$0xff] %v1252
    %1285 = vst [vmem:[#allocation11 + $0xf8] sm:$0xff] %v1253
    // Predicated region
    $region58: #{tpu_custom_call.1} parent=1 // pred_check
      _
    $region59: #{tpu_custom_call.1} parent=1 // pred_check_branch
      %1287 = sbr.rel (0) target = $region61
    $region60: #{tpu_custom_call.1} parent=1 // pred_region
      %s1289 = ssub.s32 4096, 4096
      %1290 = vsyncadd [#allocation4], %s1289
      %s1291 = sshll.u32 [#allocation11], 4
      %s1292 = int_to_ptr.vmem [resolvable:$true] %s1291
      %1297 = dma.vmem_to_hbm [thread:$0]  %s1292, 4096, %s9, [#allocation4], 128, 128, 8
    $region61: #{tpu_custom_call.1} parent=1 // pred_fallthru
      _
    // Predicated region
    $region62: #{tpu_custom_call.1} parent=1 // pred_check
      _
    $region63: #{tpu_custom_call.1} parent=1 // pred_check_branch
      %1299 = sbr.rel (0) target = $region65
    $region64: #{tpu_custom_call.1} parent=1 // pred_region
      %1300 = dma.done [#allocation4], 4096
    $region65: #{tpu_custom_call.1} parent=1 // pred_fallthru
      _
    %1301 = vsyncpa [#allocation3], 1
    %1302 = vsyncpa [#allocation6], 1
    %1303 = vsyncpa [#allocation9], 1
    %1304 = vsyncpa [#allocation4], 1

</llo_original>
